<compile_context>
chip_gen: v5e
topology: v5e:2x2
jax: 0.10.0
libtpu: 0.0.40
codegen_flags: <defaults>
</compile_context>

<pallas_src>
import functools
import types

import jax
import jax.numpy as jnp
from jax.experimental import pallas as pl
from jax.experimental.pallas import tpu as pltpu


def _weighted_mse_kernel(h_ref, s_ref, c_row_ref, c_col_ref, out_ref, *,
                         n_rows, tm, need_mask, scal_l1, scal_l2):
    # Stream native dtype, do all math in f32.
    h = h_ref[...].astype(jnp.float32)        # (TM, N)
    s = s_ref[...].astype(jnp.float32)        # (TM, N)
    c_row = c_row_ref[...]                    # (1, N)  fused softmax*N*w_0 (resident)
    c_col = c_col_ref[...]                    # (TM, 1) per-tile slice of the same vector

    # weight_matrix = sigmoid(c[i] * c[j]) -- single outer product (detach is a
    # forward no-op).  exp + approx reciprocal both run on the EUP slot.
    wm = pl.reciprocal(1.0 + jnp.exp(-(c_col * c_row)), approx=True)   # (TM, N)

    d1 = h - s * scal_l1
    d2 = h - s * scal_l2
    wl1 = d1 * d1 * wm
    sq2 = d2 * d2

    if need_mask:
        # Ragged last tile: zero out contributions from rows >= n_rows.
        row = pl.program_id(0) * tm + jax.lax.broadcasted_iota(jnp.int32, wm.shape, 0)
        valid = row < n_rows
        wl1 = jnp.where(valid, wl1, 0.0)
        wm = jnp.where(valid, wm, 0.0)
        sq2 = jnp.where(valid, sq2, 0.0)

    sum_wl1 = jnp.sum(wl1)                    # partial numerator of valid_loss1
    sum_wm = jnp.sum(wm)                      # partial denominator of valid_loss1
    sum_d2 = jnp.sum(sq2)                     # partial numerator of valid_loss2

    # Pack the three partial sums into this tile's lane-padded output row.
    lane = jax.lax.broadcasted_iota(jnp.int32, (1, 1, 128), 2)
    out_ref[...] = jnp.where(lane == 0, sum_wl1,
                   jnp.where(lane == 1, sum_wm,
                   jnp.where(lane == 2, sum_d2, 0.0)))


def _vmem_budget():
    """Return (vmem_limit_bytes, input_slab_budget_bytes) sized from the real chip."""
    try:
        cap = int(pltpu.get_tpu_info().vmem_capacity_bytes)
    except Exception:
        cap = 64 * 1024 * 1024          # conservative: v7x per-TensorCore physical VMEM
    # Request 75% of physical, but never more than 96 MiB: v5e/v6e have 128 MiB
    # physical (-> 96 MiB), v7x only 64 MiB (-> 48 MiB).
    vmem_limit = min((cap * 3) // 4, 96 * 1024 * 1024)
    # ~70% of the limit goes to the 2-input x 2-pipeline-buffer H/S slab; the
    # rest is headroom for the resident c_row, outputs and compiler scratch.
    slab_budget = (vmem_limit * 7) // 10
    return vmem_limit, slab_budget


def _choose_row_tile(n, itemsize, slab_budget_bytes, base):
    # Bytes streamed per row: H + S, each double-buffered by the pipeline.
    bytes_per_row = 4 * n * itemsize
    max_tm = slab_budget_bytes // max(bytes_per_row, 1)
    if max_tm >= n:
        # Whole problem fits in one tile.  For large N still split the row grid
        # so the "parallel" axis can shard across both TensorCores (v7x).
        if n >= 512:
            return pl.cdiv(pl.cdiv(n, 2), base) * base
        return n                        # single full block (any N, incl. non-multiples of 8)
    return max(base, (max_tm // base) * base)


def weighted_mse_loss_pallas(H, S, weight, w_0, opt, row_tile=None):
    n = H.shape[0]
    assert H.shape == (n, n) and S.shape == (n, n)
    assert weight.shape == (n,) and w_0.shape == (n,)

    # Fused per-sample factor, computed once as an O(N) vector op in the wrapper:
    #   c[i] = softmax(weight)[i] * N * w_0[i]   =>   weight_matrix = sigmoid(c c^T)
    c = (jax.nn.softmax(weight.astype(jnp.float32), axis=-1) * n) * w_0.astype(jnp.float32)
    c_row = c.reshape(1, n)
    c_col = c.reshape(n, 1)

    itemsize = jnp.dtype(H.dtype).itemsize
    base = max(8, 32 // itemsize)       # min sublane tile: f32 -> 8 rows, bf16 -> 16 rows
    vmem_limit, slab_budget = _vmem_budget()
    tm = int(row_tile) if row_tile is not None else _choose_row_tile(n, itemsize, slab_budget, base)
    num_tiles = pl.cdiv(n, tm)
    need_mask = (n % tm) != 0

    kernel = functools.partial(
        _weighted_mse_kernel,
        n_rows=n,
        tm=tm,
        need_mask=need_mask,
        scal_l1=float(opt.scal_l1),
        scal_l2=float(opt.scal_l2),
    )

    partials = pl.pallas_call(
        kernel,
        out_shape=jax.ShapeDtypeStruct((num_tiles, 1, 128), jnp.float32),
        grid_spec=pltpu.PrefetchScalarGridSpec(
            num_scalar_prefetch=0,
            grid=(num_tiles,),
            in_specs=[
                pl.BlockSpec((tm, n), lambda i: (i, 0)),   # H row tile (native dtype)
                pl.BlockSpec((tm, n), lambda i: (i, 0)),   # S row tile (native dtype)
                pl.BlockSpec((1, n), lambda i: (0, 0)),    # c_row: full, resident across steps
                pl.BlockSpec((tm, 1), lambda i: (i, 0)),   # c_col: per-tile slice
            ],
            out_specs=pl.BlockSpec((1, 1, 128), lambda i: (i, 0, 0)),
        ),
        compiler_params=pltpu.CompilerParams(
            dimension_semantics=("parallel",),             # row tiles shard across TCs
            vmem_limit_bytes=vmem_limit,
        ),
    )(H, S, c_row, c_col)

    sums = jnp.sum(partials[:, 0, :], axis=0)              # lanes 0..2 used
    valid_loss1 = sums[0] / sums[1]
    valid_loss2 = sums[2] / jnp.float32(n * n)
    mse = float(opt.mse)
    return valid_loss1 * mse + valid_loss2 * (1.0 - mse)


def weighted_mse_loss_ref(H, S, weight, w_0, opt):
    # Pure-JAX reference mirroring the PyTorch forward (all math in f32).
    n = weight.shape[0]
    H = H.astype(jnp.float32)
    S = S.astype(jnp.float32)
    weight = weight.astype(jnp.float32)
    w_0 = w_0.astype(jnp.float32)
    weight_S = jax.nn.softmax(weight / 1.0, axis=-1) * n
    weight_w = weight_S[:, None] * weight_S[None, :]
    weight_0 = w_0[:, None] * w_0[None, :]
    w = weight_w * weight_0
    weight_matrix = 1.0 / (1.0 + jnp.exp(-w))
    weighted_loss1 = (H - S * opt.scal_l1) ** 2 * weight_matrix
    valid_loss1 = weighted_loss1.sum() / weight_matrix.sum()
    valid_loss2 = ((H - S * opt.scal_l2) ** 2).mean()
    return valid_loss1 * opt.mse + valid_loss2 * (1 - opt.mse)


if __name__ == "__main__":
    # deterministic "opt" config (module __init__ only stores opt / temperature)
    opt = types.SimpleNamespace(scal_l1=0.5, scal_l2=1.0, mse=0.7)

    # Tolerance note: the only intentional numerical deviation from the exact
    # reference is the EUP approx reciprocal inside the sigmoid, which bounds
    # the relative error of the final scalar loss at ~5e-4 worst case.
    RTOL, ATOL = 1e-3, 1e-5

    # --- small f32 case consistent with the module: H, S are [N, N]; weight, w_0 are [N]
    N = 8
    k_h, k_s, k_w, k_w0 = jax.random.split(jax.random.PRNGKey(0), 4)
    H = jax.random.normal(k_h, (N, N), dtype=jnp.float32)
    S = jax.random.normal(k_s, (N, N), dtype=jnp.float32)
    weight = jax.random.normal(k_w, (N,), dtype=jnp.float32)
    w_0 = jax.random.uniform(k_w0, (N,), dtype=jnp.float32)

    loss = weighted_mse_loss_pallas(H, S, weight, w_0, opt)
    jax.block_until_ready(loss)
    ref = weighted_mse_loss_ref(H, S, weight, w_0, opt)
    assert jnp.allclose(loss, ref, rtol=RTOL, atol=ATOL), (loss, ref)

    # --- bf16 native-dtype streaming + multi-tile "parallel" row grid (3 tiles)
    N2 = 96
    k_h2, k_s2, k_w2, k_w02 = jax.random.split(jax.random.PRNGKey(1), 4)
    H2 = jax.random.normal(k_h2, (N2, N2), dtype=jnp.float32).astype(jnp.bfloat16)
    S2 = jax.random.normal(k_s2, (N2, N2), dtype=jnp.float32).astype(jnp.bfloat16)
    weight2 = jax.random.normal(k_w2, (N2,), dtype=jnp.float32)
    w_02 = jax.random.uniform(k_w02, (N2,), dtype=jnp.float32)

    loss2 = weighted_mse_loss_pallas(H2, S2, weight2, w_02, opt, row_tile=32)
    jax.block_until_ready(loss2)
    ref2 = weighted_mse_loss_ref(H2, S2, weight2, w_02, opt)
    assert jnp.allclose(loss2, ref2, rtol=RTOL, atol=ATOL), (loss2, ref2)

    # --- ragged N (masked last tile): 100 rows in 32-row tiles -> 4 tiles, last partial
    N3 = 100
    k_h3, k_s3, k_w3, k_w03 = jax.random.split(jax.random.PRNGKey(2), 4)
    H3 = jax.random.normal(k_h3, (N3, N3), dtype=jnp.float32)
    S3 = jax.random.normal(k_s3, (N3, N3), dtype=jnp.float32)
    weight3 = jax.random.normal(k_w3, (N3,), dtype=jnp.float32)
    w_03 = jax.random.uniform(k_w03, (N3,), dtype=jnp.float32)

    loss3 = weighted_mse_loss_pallas(H3, S3, weight3, w_03, opt, row_tile=32)
    jax.block_until_ready(loss3)
    ref3 = weighted_mse_loss_ref(H3, S3, weight3, w_03, opt)
    assert jnp.allclose(loss3, ref3, rtol=RTOL, atol=ATOL), (loss3, ref3)

    print("KERNEL_OK")
</pallas_src>

<mosaic_0001>
module attributes {stable_mosaic.version = 11 : i64} {
  func.func @_weighted_mse_kernel(%arg0: i32, %arg1: memref<8x8xf32, #tpu.memory_space<vmem>>, %arg2: memref<8x8xf32, #tpu.memory_space<vmem>>, %arg3: memref<1x8xf32, #tpu.memory_space<vmem>>, %arg4: memref<8x1xf32, #tpu.memory_space<vmem>>, %arg5: memref<1x1x128xf32, #tpu.memory_space<vmem>>) attributes {dimension_semantics = [#tpu.dimension_semantics<parallel>], iteration_bounds = array<i64: 1>, scalar_prefetch = 0 : i64, scratch_operands = 0 : i64, tpu.core_type = #tpu.core_type<tc>, window_params = [{transform_indices = @transform_0, window_bounds = array<i64: 8, 8>}, {transform_indices = @transform_1, window_bounds = array<i64: 8, 8>}, {pipeline_mode = #tpu.pipeline_mode<synchronous>, transform_indices = @transform_2, window_bounds = array<i64: 1, 8>}, {transform_indices = @transform_3, window_bounds = array<i64: 8, 1>}, {transform_indices = @transform_4, window_bounds = array<i64: 1, 1, 128>}]} {
    %c0 = arith.constant 0 : index
    %c0_0 = arith.constant 0 : index
    %0 = vector.load %arg1[%c0, %c0_0] : memref<8x8xf32, #tpu.memory_space<vmem>>, vector<8x8xf32>
    %c0_1 = arith.constant 0 : index
    %c0_2 = arith.constant 0 : index
    %1 = vector.load %arg2[%c0_1, %c0_2] : memref<8x8xf32, #tpu.memory_space<vmem>>, vector<8x8xf32>
    %c0_3 = arith.constant 0 : index
    %c0_4 = arith.constant 0 : index
    %2 = vector.load %arg3[%c0_3, %c0_4] : memref<1x8xf32, #tpu.memory_space<vmem>>, vector<1x8xf32>
    %c0_5 = arith.constant 0 : index
    %c0_6 = arith.constant 0 : index
    %3 = vector.load %arg4[%c0_5, %c0_6] : memref<8x1xf32, #tpu.memory_space<vmem>>, vector<8x1xf32>
    %4 = vector.broadcast %3 : vector<8x1xf32> to vector<8x8xf32>
    %5 = vector.broadcast %2 : vector<1x8xf32> to vector<8x8xf32>
    %6 = arith.mulf %4, %5 : vector<8x8xf32>
    %cst = arith.constant 0.000000e+00 : f32
    %7 = vector.broadcast %cst : f32 to vector<8x8xf32>
    %8 = arith.subf %7, %6 : vector<8x8xf32>
    %9 = math.exp %8 : vector<8x8xf32>
    %cst_7 = arith.constant 1.000000e+00 : f32
    %10 = vector.broadcast %cst_7 : f32 to vector<8x8xf32>
    %11 = arith.addf %10, %9 : vector<8x8xf32>
    %12 = tpu.reciprocal %11 {approx = true} : vector<8x8xf32> -> vector<8x8xf32>
    %cst_8 = arith.constant 5.000000e-01 : f32
    %13 = vector.broadcast %cst_8 : f32 to vector<8x8xf32>
    %14 = arith.mulf %1, %13 : vector<8x8xf32>
    %15 = arith.subf %0, %14 : vector<8x8xf32>
    %cst_9 = arith.constant 1.000000e+00 : f32
    %16 = vector.broadcast %cst_9 : f32 to vector<8x8xf32>
    %17 = arith.mulf %1, %16 : vector<8x8xf32>
    %18 = arith.subf %0, %17 : vector<8x8xf32>
    %19 = arith.mulf %15, %15 : vector<8x8xf32>
    %20 = arith.mulf %19, %12 : vector<8x8xf32>
    %21 = arith.mulf %18, %18 : vector<8x8xf32>
    %22 = vector.shape_cast %20 : vector<8x8xf32> to vector<1x8x8xf32>
    %cst_10 = arith.constant dense<0.000000e+00> : vector<1xf32>
    %23 = vector.multi_reduction <add>, %22, %cst_10 [1, 2] : vector<1x8x8xf32> to vector<1xf32>
    %24 = vector.shape_cast %23 : vector<1xf32> to vector<1x1x1xf32>
    %25 = vector.extract %24[0, 0, 0] : f32 from vector<1x1x1xf32>
    %26 = vector.shape_cast %12 : vector<8x8xf32> to vector<1x8x8xf32>
    %cst_11 = arith.constant dense<0.000000e+00> : vector<1xf32>
    %27 = vector.multi_reduction <add>, %26, %cst_11 [1, 2] : vector<1x8x8xf32> to vector<1xf32>
    %28 = vector.shape_cast %27 : vector<1xf32> to vector<1x1x1xf32>
    %29 = vector.extract %28[0, 0, 0] : f32 from vector<1x1x1xf32>
    %30 = vector.shape_cast %21 : vector<8x8xf32> to vector<1x8x8xf32>
    %cst_12 = arith.constant dense<0.000000e+00> : vector<1xf32>
    %31 = vector.multi_reduction <add>, %30, %cst_12 [1, 2] : vector<1x8x8xf32> to vector<1xf32>
    %32 = vector.shape_cast %31 : vector<1xf32> to vector<1x1x1xf32>
    %33 = vector.extract %32[0, 0, 0] : f32 from vector<1x1x1xf32>
    %34 = tpu.iota {dimensions = array<i32: 2>} : vector<1x1x128xi32>
    %c0_i32 = arith.constant 0 : i32
    %35 = vector.broadcast %c0_i32 : i32 to vector<1x1x128xi32>
    %36 = arith.cmpi eq, %34, %35 : vector<1x1x128xi32>
    %c1_i32 = arith.constant 1 : i32
    %37 = vector.broadcast %c1_i32 : i32 to vector<1x1x128xi32>
    %38 = arith.cmpi eq, %34, %37 : vector<1x1x128xi32>
    %c2_i32 = arith.constant 2 : i32
    %39 = vector.broadcast %c2_i32 : i32 to vector<1x1x128xi32>
    %40 = arith.cmpi eq, %34, %39 : vector<1x1x128xi32>
    %cst_13 = arith.constant 0.000000e+00 : f32
    %41 = vector.broadcast %33 : f32 to vector<1x1x128xf32>
    %42 = vector.broadcast %cst_13 : f32 to vector<1x1x128xf32>
    %43 = arith.select %40, %41, %42 : vector<1x1x128xi1>, vector<1x1x128xf32>
    %44 = vector.broadcast %29 : f32 to vector<1x1x128xf32>
    %45 = arith.select %38, %44, %43 : vector<1x1x128xi1>, vector<1x1x128xf32>
    %46 = vector.broadcast %25 : f32 to vector<1x1x128xf32>
    %47 = arith.select %36, %46, %45 : vector<1x1x128xi1>, vector<1x1x128xf32>
    %c0_14 = arith.constant 0 : index
    %c0_15 = arith.constant 0 : index
    %c0_16 = arith.constant 0 : index
    %48 = vector.load %arg5[%c0_14, %c0_15, %c0_16] : memref<1x1x128xf32, #tpu.memory_space<vmem>>, vector<1x1x128xf32>
    tpu.vector_store %arg5[%c0_14, %c0_15, %c0_16], %47 {strides = array<i32>} : memref<1x1x128xf32, #tpu.memory_space<vmem>>, vector<1x1x128xf32>,
    return
  }
  func.func @transform_0(%arg0: i32) -> (i32, i32) {
    %c0_i32 = arith.constant 0 : i32
    %c0_i32_0 = arith.constant 0 : i32
    return %arg0, %c0_i32 : i32, i32
  }
  func.func @transform_1(%arg0: i32) -> (i32, i32) {
    %c0_i32 = arith.constant 0 : i32
    %c0_i32_0 = arith.constant 0 : i32
    return %arg0, %c0_i32 : i32, i32
  }
  func.func @transform_2(%arg0: i32) -> (i32, i32) {
    %c0_i32 = arith.constant 0 : i32
    %c0_i32_0 = arith.constant 0 : i32
    %c0_i32_1 = arith.constant 0 : i32
    return %c0_i32, %c0_i32_0 : i32, i32
  }
  func.func @transform_3(%arg0: i32) -> (i32, i32) {
    %c0_i32 = arith.constant 0 : i32
    %c0_i32_0 = arith.constant 0 : i32
    return %arg0, %c0_i32 : i32, i32
  }
  func.func @transform_4(%arg0: i32) -> (i32, i32, i32) {
    %c0_i32 = arith.constant 0 : i32
    %c0_i32_0 = arith.constant 0 : i32
    %c0_i32_1 = arith.constant 0 : i32
    return %arg0, %c0_i32, %c0_i32_0 : i32, i32, i32
  }
}

</mosaic_0001>

<llo_original>
// kernel: tpu_custom_call.1
$region0: #{tpu_custom_call.1}
  #allocation0 [shape = 'u32[]', space=smem, size = 0x4, offset = 0x4, fixed_abs, tag = 'smem constant byte address 0x4 - core index']
  #allocation1 [shape = 'u32[72,128]{1,0:T(1,128)}', space=vmem, size = 0x9000, scoped, tag = 'internal scratch']
  %s0 = inlined_call_operand.vmem [shape: f32[8,8], index: 0, kind: input, shape index: {}]
  %s1 = inlined_call_operand.hbm [shape: f32[8,8], index: 1, kind: input, shape index: {}]
  %s2 = inlined_call_operand.vmem [shape: f32[1,8], index: 2, kind: input, shape index: {}]
  %s3 = inlined_call_operand.vmem [shape: f32[8,1], index: 3, kind: input, shape index: {}]
  %s4 = inlined_call_operand.hbm [shape: f32[1,1,128], index: 4, kind: output, shape index: {}]
  %s5 = sld [smem:[#allocation0]]
  $region30: #{tpu_custom_call.1} parent=0
    _
  %s7 = ssub.s32 1, %s5
  %s8 = scalar_select 0, %s7, %s5
  $region1: #{tpu_custom_call.1} parent=0
    #allocation2 [shape = 'u8[4096]{0}', space=vmem, size = 0x1000, scoped, tag = 'input window, operand 1, single buffered']
    #allocation3 [shape = 's32[1]{0}', space=sflag, size = 0x4, scoped, tag = 'scoped memory for tpu_custom_call.1']
    #allocation4 [shape = 's32[1]{0}', space=sflag, size = 0x4, scoped, tag = 'scoped memory for tpu_custom_call.1']
    #allocation5 [shape = 'u8[512]{0}', space=vmem, size = 0x400, scoped, tag = 'output window, operand 0, single buffered']
    %9 = vsyncpa [#allocation3], 0
    %10 = vsyncpa [#allocation4], 0
    // Predicated region
    $region2: #{tpu_custom_call.1} parent=1 // pred_check
      _
    $region3: #{tpu_custom_call.1} parent=1 // pred_check_branch
      %12 = sbr.rel (0) target = $region5
    $region4: #{tpu_custom_call.1} parent=1 // pred_region
      _
    $region5: #{tpu_custom_call.1} parent=1 // pred_fallthru
      _
    // Predicated region
    $region6: #{tpu_custom_call.1} parent=1 // pred_check
      _
    $region7: #{tpu_custom_call.1} parent=1 // pred_check_branch
      %14 = sbr.rel (0) target = $region9
    $region8: #{tpu_custom_call.1} parent=1 // pred_region
      %16 = vsyncadd [#allocation3], 0
      %s18 = sshll.u32 %s1, 4
      %s19 = int_to_ptr.hbm [resolvable:$true] %s18
      %s20 = sshll.u32 [#allocation2], 4
      %s21 = int_to_ptr.vmem [resolvable:$true] %s20
      %23 = dma.hbm_to_vmem [thread:$0]  %s19, 128, %s21, [#allocation3]
    $region9: #{tpu_custom_call.1} parent=1 // pred_fallthru
      _
    // Predicated region
    $region10: #{tpu_custom_call.1} parent=1 // pred_check
      _
    $region11: #{tpu_custom_call.1} parent=1 // pred_check_branch
      %25 = sbr.rel (0) target = $region13
    $region12: #{tpu_custom_call.1} parent=1 // pred_region
      _
    $region13: #{tpu_custom_call.1} parent=1 // pred_fallthru
      _
    // Predicated region
    $region14: #{tpu_custom_call.1} parent=1 // pred_check
      _
    $region15: #{tpu_custom_call.1} parent=1 // pred_check_branch
      %27 = sbr.rel (0) target = $region17
    $region16: #{tpu_custom_call.1} parent=1 // pred_region
      _
    $region17: #{tpu_custom_call.1} parent=1 // pred_fallthru
      _
    // Predicated region
    $region18: #{tpu_custom_call.1} parent=1 // pred_check
      _
    $region19: #{tpu_custom_call.1} parent=1 // pred_check_branch
      %29 = sbr.rel (0) target = $region21
    $region20: #{tpu_custom_call.1} parent=1 // pred_region
      %31 = dma.done [#allocation3], 128
    $region21: #{tpu_custom_call.1} parent=1 // pred_fallthru
      _
    %v32 = vld [vmem:[%s0] sm:$0xff]
    %v33 = vld [vmem:[#allocation2] sm:$0xff]
    %v34 = vld [vmem:[%s2] sm:$0x1]
    %v35 = vld [vmem:[%s3] sm:$0xff]
    %37 = vset.pattern.permute.xlu0 0
    %38 = vperm.xlu0 %37, %v35
    %v39 = vpop.permute.xlu0 %38
    %v42 = vperm.slane %v34, 0
    %v44 = vmul.f32 %v39, %v42
    %v45 = vsub.f32 0.0, %v44
    %v46 = vmul.f32 %v45, 1.442695
    %v47 = vpow.pop %v46
    %v48 = vadd.f32 %v47, 1.0
    %v49 = vrcp.pop %v48
    %v50 = vmul.f32 %v33, 0.5
    %v51 = vsub.f32 %v32, %v50
    %v52 = vsub.f32 %v32, %v33
    %v53 = vmul.f32 %v51, %v51
    %v54 = vmul.f32 %v53, %v49
    %v55 = vmul.f32 %v52, %v52
    %vm56 = vcmask 64512
    %v57 = vsel %vm56, %v54, 0.0
    %58 = vadd.xlane.f32.xlu0 %v57
    %v59 = vpop.xlane.xlu0 %58
    %v60 = vrot.slane %v59, 4
    %v61 = vadd.f32 %v59, %v60
    %v62 = vrot.slane %v61, 2
    %v63 = vadd.f32 %v61, %v62
    %v64 = vrot.slane %v63, 1
    %v65 = vadd.f32 %v63, %v64
    %s66 = vtos %v65
    %v67 = vsel %vm56, %v49, 0.0
    %68 = vadd.xlane.f32.xlu0 %v67
    %v69 = vpop.xlane.xlu0 %68
    %v70 = vrot.slane %v69, 4
    %v71 = vadd.f32 %v69, %v70
    %v72 = vrot.slane %v71, 2
    %v73 = vadd.f32 %v71, %v72
    %v74 = vrot.slane %v73, 1
    %v75 = vadd.f32 %v73, %v74
    %s76 = vtos %v75
    %v77 = vsel %vm56, %v55, 0.0
    %78 = vadd.xlane.f32.xlu0 %v77
    %v79 = vpop.xlane.xlu0 %78
    %v80 = vrot.slane %v79, 4
    %v81 = vadd.f32 %v79, %v80
    %v82 = vrot.slane %v81, 2
    %v83 = vadd.f32 %v81, %v82
    %v84 = vrot.slane %v83, 1
    %v85 = vadd.f32 %v83, %v84
    %s86 = vtos %v85
    %v87 = vlaneseq
    %v88 = vand.u32 %v87, 127
    %vm89 = vcmp.eq.s32.totalorder %v88, 0
    %vm90 = vcmp.eq.s32.totalorder %v88, 1
    %vm91 = vcmp.eq.s32.totalorder %v88, 2
    %v92 = vstv %s86
    %v93 = vsel %vm91, %v92, 0.0
    %v94 = vstv %s76
    %v95 = vsel %vm90, %v94, %v93
    %v96 = vstv %s66
    %v97 = vsel %vm89, %v96, %v95
    %98 = vst [vmem:[#allocation5] sm:$0x1] %v97
    // Predicated region
    $region22: #{tpu_custom_call.1} parent=1 // pred_check
      _
    $region23: #{tpu_custom_call.1} parent=1 // pred_check_branch
      %100 = sbr.rel (0) target = $region25
    $region24: #{tpu_custom_call.1} parent=1 // pred_region
      %102 = vsyncadd [#allocation4], 0
      %s104 = sshll.u32 [#allocation5], 4
      %s105 = int_to_ptr.vmem [resolvable:$true] %s104
      %s106 = sshll.u32 %s4, 4
      %s107 = int_to_ptr.hbm [resolvable:$true] %s106
      %109 = dma.vmem_to_hbm [thread:$0]  %s105, 16, %s107, [#allocation4]
    $region25: #{tpu_custom_call.1} parent=1 // pred_fallthru
      _
    // Predicated region
    $region26: #{tpu_custom_call.1} parent=1 // pred_check
      _
    $region27: #{tpu_custom_call.1} parent=1 // pred_check_branch
      %111 = sbr.rel (0) target = $region29
    $region28: #{tpu_custom_call.1} parent=1 // pred_region
      %113 = dma.done [#allocation4], 16
    $region29: #{tpu_custom_call.1} parent=1 // pred_fallthru
      _
    %114 = vsyncpa [#allocation3], 1
    %115 = vsyncpa [#allocation4], 1

</llo_original>
